<compile_context>
chip_gen: v7x
topology: tpu7x:2x2x1
jax: 0.10.0
libtpu: 0.0.40
codegen_flags: <defaults>
</compile_context>

<pallas_src>
import functools

import jax
import jax.numpy as jnp
from jax.experimental import pallas as pl
from jax.experimental.pallas import tpu as pltpu


def _round_up(x, m):
    return ((x + m - 1) // m) * m


def _pick_tile(dim, target, align):
    """Pick a tile size: multiple of `align`, <= target, <= aligned dim.

    Prefers a tile in [2/3 * target, target] that divides the aligned dim
    exactly (zero padding); otherwise the tile in that range minimizing
    padding (ties broken toward the larger tile)."""
    dim_a = _round_up(max(dim, 1), align)
    t_max = max(align, min((target // align) * align, dim_a))
    t_min = max(align, ((t_max * 2) // 3) // align * align)
    best_t = t_max
    best_waste = _round_up(dim_a, t_max) - dim_a
    t = t_max
    while t >= t_min:
        waste = _round_up(dim_a, t) - dim_a
        if waste < best_waste:
            best_t, best_waste = t, waste
            if waste == 0:
                break
        t -= align
    return best_t


def _row_linear_kernel(*refs, add_bias):
    # With bias:    (x_ref, w_ref, b_ref, o_ref, acc_ref)
    # Without bias: (x_ref, w_ref,        o_ref, acc_ref)
    if add_bias:
        x_ref, w_ref, b_ref, o_ref, acc_ref = refs
    else:
        x_ref, w_ref, o_ref, acc_ref = refs
        b_ref = None

    k = pl.program_id(2)

    # (tm, tk) @ (tk, tn) -> (tm, tn).  Weight tile is already [K, N], so this
    # is the standard MXU contraction with no in-loop transpose/relayout.
    partial = jnp.dot(x_ref[...], w_ref[...],
                      preferred_element_type=jnp.float32)

    @pl.when(k == 0)
    def _():
        # First K step: store the partial product directly (saves a full
        # (tm,tn) f32 zero-store + VPU add per output tile).
        acc_ref[...] = partial

    @pl.when(k > 0)
    def _():
        acc_ref[...] += partial

    @pl.when(k == pl.num_programs(2) - 1)
    def _():
        acc = acc_ref[...]
        if add_bias:
            # Bias added at f32 accumulator precision before the downcast.
            acc = acc + b_ref[...].astype(jnp.float32)
        o_ref[...] = acc.astype(o_ref.dtype)


def row_parallel_linear(x, weight, bias=None, *, skip_bias_add=False,
                        weight_transposed=False, compute_dtype=None,
                        tm=None, tn=None, tk=None):
    """Forward of RowParallelLinear (single TP partition).

    Args:
      x:      [seq, batch, input_size]
      weight: [output_size, input_size] (F.linear layout), or [input_size,
              output_size] if weight_transposed=True.
      bias:   [output_size] or None
      skip_bias_add: if True, return bias separately instead of adding it.
      compute_dtype: optional dtype to cast operands to (e.g. jnp.bfloat16).
      tm/tn/tk: optional tile overrides; picked per TPU generation otherwise.

    Returns:
      (output [seq, batch, output_size], output_bias)
    """
    S, B, K = x.shape
    if weight_transposed:
        Kw, N = weight.shape
        w_kn = weight
    else:
        N, Kw = weight.shape
        # TODO(synk): store the weight pre-transposed ([K, N]) in production to
        # remove this per-call HBM relayout entirely.
        w_kn = weight.T
    assert K == Kw, "input hidden dim must match weight in_features"

    M = S * B
    x2d = x.reshape(M, K)
    out_dtype = x.dtype
    if compute_dtype is not None:
        x2d = x2d.astype(compute_dtype)
        w_kn = w_kn.astype(compute_dtype)
    add_bias = (bias is not None) and (not skip_bias_add)

    # ---- Generation-aware tile targets & VMEM budget ----------------------
    try:
        vmem_cap = int(pltpu.get_tpu_info().vmem_capacity_bytes)
    except Exception:
        vmem_cap = 64 << 20  # conservative fallback (v7x-class sizing)
    if vmem_cap >= (96 << 20):            # v5e / v6e: 128 MiB physical VMEM
        tm_t, tn_t, tk_t = 1024, 1536, 1024
        vmem_budget = int(vmem_cap * 0.85)
    else:                                  # v7x-class: 64 MiB per-TC VMEM
        tm_t, tn_t, tk_t = 768, 1024, 1024
        vmem_budget = int(vmem_cap * 0.78)

    # Skinny-M (decode) falls out naturally: tm clamps to the full (aligned) M,
    # so there is exactly one M block and W is streamed from HBM exactly once.
    if tm is None:
        tm = _pick_tile(M, tm_t, 8)
    else:
        tm = max(8, min(_round_up(tm, 8), _round_up(M, 8)))
    if tn is None:
        tn = _pick_tile(N, tn_t, 128)
    else:
        tn = max(128, min(_round_up(tn, 128), _round_up(N, 128)))
    if tk is None:
        tk = _pick_tile(K, tk_t, 128)
    else:
        tk = max(128, min(_round_up(tk, 128), _round_up(K, 128)))

    xsz = x2d.dtype.itemsize
    wsz = w_kn.dtype.itemsize
    osz = jnp.dtype(out_dtype).itemsize

    def _need(tm_, tn_, tk_):
        tiles = (tm_ * tk_ * xsz + tk_ * tn_ * wsz + tm_ * tn_ * osz
                 + (tn_ * 4 if add_bias else 0))
        return 2 * tiles + tm_ * tn_ * 4   # double-buffered tiles + f32 acc

    # Safety: shrink (largest dim first) if a custom config would blow VMEM.
    while _need(tm, tn, tk) > vmem_budget and (tk > 128 or tn > 128 or tm > 8):
        if tk >= tn and tk >= tm and tk > 128:
            tk = max(128, _round_up(tk // 2, 128))
        elif tn >= tm and tn > 128:
            tn = max(128, _round_up(tn // 2, 128))
        else:
            tm = max(8, _round_up(tm // 2, 8))

    Mp = _round_up(M, tm)
    Np = _round_up(N, tn)
    Kp = _round_up(K, tk)

    # Expose >=2 blocks on the 'parallel' axes so v7x's two TensorCores both
    # get work (free on single-TC chips; only triggers for single-tile grids).
    if (Mp // tm) * (Np // tn) < 2:
        if tn >= 256 and (tn // 2) % 128 == 0:
            tn //= 2
        elif tm >= 256 and (tm // 2) % 8 == 0:
            tm //= 2

    # Zero-padding is exact: padded K contributes 0 to the contraction; padded
    # M rows / N cols are sliced off below.  Tile picker keeps padding at 0 for
    # typical transformer dims.
    if (Mp, Kp) != (M, K):
        x2d = jnp.pad(x2d, ((0, Mp - M), (0, Kp - K)))
    if (Kp, Np) != (K, N):
        w_kn = jnp.pad(w_kn, ((0, Kp - K), (0, Np - N)))

    grid = (Mp // tm, Np // tn, Kp // tk)
    gm, gn, gk = grid

    in_specs = [
        pl.BlockSpec((tm, tk), lambda i, j, k: (i, k)),   # activations [M, K]
        pl.BlockSpec((tk, tn), lambda i, j, k: (k, j)),   # weight [K, N]
    ]
    inputs = [x2d, w_kn]
    if add_bias:
        b2d = bias.astype(jnp.float32).reshape(1, N)
        if Np != N:
            b2d = jnp.pad(b2d, ((0, 0), (0, Np - N)))
        in_specs.append(pl.BlockSpec((1, tn), lambda i, j, k: (0, j)))
        inputs.append(b2d)

    kernel = functools.partial(_row_linear_kernel, add_bias=add_bias)

    need = _need(tm, tn, tk)
    vmem_limit = int(min(vmem_budget, max(2 * need, 32 << 20)))

    # Real streamed traffic: A is read once per N block, W once per M block.
    cost = pl.CostEstimate(
        flops=2 * Mp * Np * Kp,
        transcendentals=0,
        bytes_accessed=(gn * Mp * Kp * xsz
                        + gm * Np * Kp * wsz
                        + Mp * Np * osz),
    )

    out2d = pl.pallas_call(
        kernel,
        out_shape=jax.ShapeDtypeStruct((Mp, Np), out_dtype),
        grid_spec=pltpu.PrefetchScalarGridSpec(
            num_scalar_prefetch=0,
            grid=grid,
            in_specs=in_specs,
            out_specs=pl.BlockSpec((tm, tn), lambda i, j, k: (i, j)),
            scratch_shapes=[pltpu.VMEM((tm, tn), jnp.float32)],
        ),
        compiler_params=pltpu.CompilerParams(
            dimension_semantics=("parallel", "parallel", "arbitrary"),
            vmem_limit_bytes=vmem_limit,
        ),
        cost_estimate=cost,
    )(*inputs)

    output = out2d[:M, :N].reshape(S, B, N)
    output_bias = bias if skip_bias_add else None
    # TODO(synk): tensor-parallel scatter / all-reduce
    # (scatter_to_tensor_model_parallel_region / reduce_from_tensor_model_parallel_region)
    # are identity at world_size == 1; cross-device RDMA not emulated here.
    return output, output_bias


if __name__ == "__main__":
    key = jax.random.PRNGKey(0)
    kx, kw, kb, kx2, kw2 = jax.random.split(key, 5)

    # ---- Test A: f32, small unaligned shapes (exercises padding path) ----
    seq, batch, input_size, output_size = 8, 2, 32, 32
    x = jax.random.normal(kx, (seq, batch, input_size), dtype=jnp.float32)
    weight = (0.02 * jax.random.normal(
        kw, (output_size, input_size), dtype=jnp.float32))
    # Module zero-inits bias; use a nonzero bias here to actually verify the
    # fused bias-add path numerically.
    bias = 0.1 * jax.random.normal(kb, (output_size,), dtype=jnp.float32)

    out, out_bias = row_parallel_linear(x, weight, bias, skip_bias_add=False)
    out = jax.block_until_ready(out)

    ref = jnp.einsum("sbk,nk->sbn", x, weight) + bias
    assert out.shape == (seq, batch, output_size)
    assert out_bias is None
    assert jnp.allclose(out, ref, atol=1e-5, rtol=1e-5), "f32 path mismatch"

    # ---- Test B: bf16, aligned shapes, skip_bias_add=True ----
    seq2, batch2, in2, out2 = 16, 4, 256, 256
    x_b = jax.random.normal(kx2, (seq2, batch2, in2), dtype=jnp.float32)
    w_b = 0.02 * jax.random.normal(kw2, (out2, in2), dtype=jnp.float32)
    x_bf = x_b.astype(jnp.bfloat16)
    w_bf = w_b.astype(jnp.bfloat16)
    b_bf = jnp.zeros((out2,), dtype=jnp.bfloat16)

    y, y_bias = row_parallel_linear(x_bf, w_bf, b_bf, skip_bias_add=True)
    y = jax.block_until_ready(y)

    ref_b = jnp.einsum("sbk,nk->sbn",
                       x_bf.astype(jnp.float32), w_bf.astype(jnp.float32))
    assert y.shape == (seq2, batch2, out2)
    assert y.dtype == jnp.bfloat16
    assert y_bias is b_bf
    assert jnp.allclose(y.astype(jnp.float32), ref_b, atol=1e-2, rtol=1e-2), \
        "bf16 path mismatch"

    print("KERNEL_OK")
</pallas_src>

<mosaic_0001>
module attributes {stable_mosaic.version = 11 : i64} {
  func.func @_row_linear_kernel(%arg0: i32, %arg1: i32, %arg2: i32, %arg3: memref<16x128xf32, #tpu.memory_space<vmem>>, %arg4: memref<128x128xf32, #tpu.memory_space<vmem>>, %arg5: memref<1x128xf32, #tpu.memory_space<vmem>>, %arg6: memref<16x128xf32, #tpu.memory_space<vmem>>, %arg7: memref<16x128xf32, #tpu.memory_space<vmem>>) attributes {dimension_semantics = [#tpu.dimension_semantics<parallel>, #tpu.dimension_semantics<parallel>, #tpu.dimension_semantics<arbitrary>], iteration_bounds = array<i64: 1, 1, 1>, scalar_prefetch = 0 : i64, scratch_operands = 1 : i64, tpu.core_type = #tpu.core_type<tc>, window_params = [{transform_indices = @transform_0, window_bounds = array<i64: 16, 128>}, {transform_indices = @transform_1, window_bounds = array<i64: 128, 128>}, {transform_indices = @transform_2, window_bounds = array<i64: 1, 128>}, {transform_indices = @transform_3, window_bounds = array<i64: 16, 128>}]} {
    %c0 = arith.constant 0 : index
    %c0_0 = arith.constant 0 : index
    %0 = vector.load %arg3[%c0, %c0_0] : memref<16x128xf32, #tpu.memory_space<vmem>>, vector<16x128xf32>
    %c0_1 = arith.constant 0 : index
    %c0_2 = arith.constant 0 : index
    %1 = vector.load %arg4[%c0_1, %c0_2] : memref<128x128xf32, #tpu.memory_space<vmem>>, vector<128x128xf32>
    %cst = arith.constant dense<0.000000e+00> : vector<16x128xf32>
    %2 = tpu.matmul %0, %1, %cst {dimension_numbers = #tpu.dot_dimension_numbers<[1], [0], [0], [1], [0, 0, 1, 1], [], []>} : vector<16x128xf32>, vector<128x128xf32>, vector<16x128xf32> -> vector<16x128xf32>
    %c0_i32 = arith.constant 0 : i32
    %3 = arith.cmpi eq, %arg2, %c0_i32 : i32
    %4 = arith.extui %3 : i1 to i32
    %c0_i32_3 = arith.constant 0 : i32
    %5 = arith.cmpi ne, %4, %c0_i32_3 : i32
    scf.if %5 {
      %c0_8 = arith.constant 0 : index
      %c0_9 = arith.constant 0 : index
      %12 = vector.load %arg7[%c0_8, %c0_9] : memref<16x128xf32, #tpu.memory_space<vmem>>, vector<16x128xf32>
      tpu.vector_store %arg7[%c0_8, %c0_9], %2 {strides = array<i32>} : memref<16x128xf32, #tpu.memory_space<vmem>>, vector<16x128xf32>,
    } else {
    }
    %c0_i32_4 = arith.constant 0 : i32
    %6 = arith.cmpi sgt, %arg2, %c0_i32_4 : i32
    %7 = arith.extui %6 : i1 to i32
    %c0_i32_5 = arith.constant 0 : i32
    %8 = arith.cmpi ne, %7, %c0_i32_5 : i32
    scf.if %8 {
      %c0_8 = arith.constant 0 : index
      %c0_9 = arith.constant 0 : index
      %12 = vector.load %arg7[%c0_8, %c0_9] : memref<16x128xf32, #tpu.memory_space<vmem>>, vector<16x128xf32>
      %13 = arith.addf %12, %2 : vector<16x128xf32>
      %c0_10 = arith.constant 0 : index
      %c0_11 = arith.constant 0 : index
      %14 = vector.load %arg7[%c0_10, %c0_11] : memref<16x128xf32, #tpu.memory_space<vmem>>, vector<16x128xf32>
      tpu.vector_store %arg7[%c0_10, %c0_11], %13 {strides = array<i32>} : memref<16x128xf32, #tpu.memory_space<vmem>>, vector<16x128xf32>,
    } else {
    }
    %c0_i32_6 = arith.constant 0 : i32
    %9 = arith.cmpi eq, %arg2, %c0_i32_6 : i32
    %10 = arith.extui %9 : i1 to i32
    %c0_i32_7 = arith.constant 0 : i32
    %11 = arith.cmpi ne, %10, %c0_i32_7 : i32
    scf.if %11 {
      %c0_8 = arith.constant 0 : index
      %c0_9 = arith.constant 0 : index
      %12 = vector.load %arg7[%c0_8, %c0_9] : memref<16x128xf32, #tpu.memory_space<vmem>>, vector<16x128xf32>
      %c0_10 = arith.constant 0 : index
      %c0_11 = arith.constant 0 : index
      %13 = vector.load %arg5[%c0_10, %c0_11] : memref<1x128xf32, #tpu.memory_space<vmem>>, vector<1x128xf32>
      %14 = vector.broadcast %13 : vector<1x128xf32> to vector<16x128xf32>
      %15 = arith.addf %12, %14 : vector<16x128xf32>
      %c0_12 = arith.constant 0 : index
      %c0_13 = arith.constant 0 : index
      %16 = vector.load %arg6[%c0_12, %c0_13] : memref<16x128xf32, #tpu.memory_space<vmem>>, vector<16x128xf32>
      tpu.vector_store %arg6[%c0_12, %c0_13], %15 {strides = array<i32>} : memref<16x128xf32, #tpu.memory_space<vmem>>, vector<16x128xf32>,
    } else {
    }
    return
  }
  func.func @transform_0(%arg0: i32, %arg1: i32, %arg2: i32) -> (i32, i32) {
    %c0_i32 = arith.constant 0 : i32
    return %arg0, %arg2 : i32, i32
  }
  func.func @transform_1(%arg0: i32, %arg1: i32, %arg2: i32) -> (i32, i32) {
    %c0_i32 = arith.constant 0 : i32
    return %arg2, %arg1 : i32, i32
  }
  func.func @transform_2(%arg0: i32, %arg1: i32, %arg2: i32) -> (i32, i32) {
    %c0_i32 = arith.constant 0 : i32
    %c0_i32_0 = arith.constant 0 : i32
    return %c0_i32, %arg1 : i32, i32
  }
  func.func @transform_3(%arg0: i32, %arg1: i32, %arg2: i32) -> (i32, i32) {
    %c0_i32 = arith.constant 0 : i32
    return %arg0, %arg1 : i32, i32
  }
}

</mosaic_0001>

<llo_original>
// kernel: tpu_custom_call.1
$region0: #{tpu_custom_call.1}
  #allocation0 [shape = 'u32[]', space=smem, size = 0x4, offset = 0x4, fixed_abs, tag = 'smem constant byte address 0x4 - core index']
  #allocation1 [shape = 'u32[144,128]{1,0:T(1,128)}', space=vmem, size = 0x12000, scoped, tag = 'internal scratch']
  #allocation2 [shape = 'f32[16,128]{1,0:T(8,128)}', space=vmem, size = 0x2000, scoped, tag = 'scratch operand']
  %s0 = inlined_call_operand.hbm [shape: f32[16,128], index: 0, kind: input, shape index: {}]
  %s1 = inlined_call_operand.hbm [shape: f32[128,128], index: 1, kind: input, shape index: {}]
  %s2 = inlined_call_operand.vmem [shape: f32[1,128], index: 2, kind: input, shape index: {}]
  %s3 = inlined_call_operand.hbm [shape: f32[16,128], index: 3, kind: output, shape index: {}]
  %s4 = sld [smem:[#allocation0]]
  $region42: #{tpu_custom_call.1} parent=0
    _
  %s6 = ssub.s32 1, %s4
  %s7 = scalar_select 0, %s6, %s4
  $region1: #{tpu_custom_call.1} parent=0
    #allocation3 [shape = 'u8[8192]{0}', space=vmem, size = 0x2000, scoped, tag = 'input window, operand 0, single buffered']
    #allocation4 [shape = 's32[1]{0}', space=sflag, size = 0x4, scoped, tag = 'scoped memory for tpu_custom_call.1']
    #allocation5 [shape = 's32[1]{0}', space=sflag, size = 0x4, scoped, tag = 'scoped memory for tpu_custom_call.1']
    #allocation6 [shape = 'u8[65536]{0}', space=vmem, size = 0x10000, scoped, tag = 'input window, operand 1, single buffered']
    #allocation7 [shape = 's32[1]{0}', space=sflag, size = 0x4, scoped, tag = 'scoped memory for tpu_custom_call.1']
    #allocation8 [shape = 'u8[8192]{0}', space=vmem, size = 0x2000, scoped, tag = 'output window, operand 0, single buffered']
    %8 = vsyncpa [#allocation4], 0
    %9 = vsyncpa [#allocation7], 0
    %10 = vsyncpa [#allocation5], 0
    // Predicated region
    $region2: #{tpu_custom_call.1} parent=1 // pred_check
      _
    $region3: #{tpu_custom_call.1} parent=1 // pred_check_branch
      %12 = sbr.rel (0) target = $region5
    $region4: #{tpu_custom_call.1} parent=1 // pred_region
      %s14 = ssub.s32 256, 256
      %15 = vsyncadd [#allocation4], %s14
      %s16 = sshll.u32 [#allocation3], 4
      %s17 = int_to_ptr.vmem [resolvable:$true] %s16
      %22 = dma.hbm_to_vmem [thread:$0]  %s0, 256, %s17, [#allocation4], 128, 128, 8
    $region5: #{tpu_custom_call.1} parent=1 // pred_fallthru
      _
    // Predicated region
    $region6: #{tpu_custom_call.1} parent=1 // pred_check
      _
    $region7: #{tpu_custom_call.1} parent=1 // pred_check_branch
      %24 = sbr.rel (0) target = $region9
    $region8: #{tpu_custom_call.1} parent=1 // pred_region
      %s26 = ssub.s32 2048, 2048
      %27 = vsyncadd [#allocation7], %s26
      %s28 = sshll.u32 [#allocation6], 4
      %s29 = int_to_ptr.vmem [resolvable:$true] %s28
      %34 = dma.hbm_to_vmem [thread:$0]  %s1, 2048, %s29, [#allocation7], 128, 128, 8
    $region9: #{tpu_custom_call.1} parent=1 // pred_fallthru
      _
    // Predicated region
    $region10: #{tpu_custom_call.1} parent=1 // pred_check
      _
    $region11: #{tpu_custom_call.1} parent=1 // pred_check_branch
      %36 = sbr.rel (0) target = $region13
    $region12: #{tpu_custom_call.1} parent=1 // pred_region
      _
    $region13: #{tpu_custom_call.1} parent=1 // pred_fallthru
      _
    // Predicated region
    $region14: #{tpu_custom_call.1} parent=1 // pred_check
      _
    $region15: #{tpu_custom_call.1} parent=1 // pred_check_branch
      %38 = sbr.rel (0) target = $region17
    $region16: #{tpu_custom_call.1} parent=1 // pred_region
      %39 = dma.done [#allocation4], 256
    $region17: #{tpu_custom_call.1} parent=1 // pred_fallthru
      _
    // Predicated region
    $region18: #{tpu_custom_call.1} parent=1 // pred_check
      _
    $region19: #{tpu_custom_call.1} parent=1 // pred_check_branch
      %41 = sbr.rel (0) target = $region21
    $region20: #{tpu_custom_call.1} parent=1 // pred_region
      %42 = dma.done [#allocation7], 2048
    $region21: #{tpu_custom_call.1} parent=1 // pred_fallthru
      _
    %v43 = vld [vmem:[#allocation3] sm:$0xff]
    %v44 = vld [vmem:[#allocation3 + $0x8] sm:$0xff]
    %v45 = vld [vmem:[#allocation6] sm:$0xff]
    %v46 = vld [vmem:[#allocation6 + $0x8] sm:$0xff]
    %v47 = vld [vmem:[#allocation6 + $0x10] sm:$0xff]
    %v48 = vld [vmem:[#allocation6 + $0x18] sm:$0xff]
    %v49 = vld [vmem:[#allocation6 + $0x20] sm:$0xff]
    %v50 = vld [vmem:[#allocation6 + $0x28] sm:$0xff]
    %v51 = vld [vmem:[#allocation6 + $0x30] sm:$0xff]
    %v52 = vld [vmem:[#allocation6 + $0x38] sm:$0xff]
    %v53 = vld [vmem:[#allocation6 + $0x40] sm:$0xff]
    %v54 = vld [vmem:[#allocation6 + $0x48] sm:$0xff]
    %v55 = vld [vmem:[#allocation6 + $0x50] sm:$0xff]
    %v56 = vld [vmem:[#allocation6 + $0x58] sm:$0xff]
    %v57 = vld [vmem:[#allocation6 + $0x60] sm:$0xff]
    %v58 = vld [vmem:[#allocation6 + $0x68] sm:$0xff]
    %v59 = vld [vmem:[#allocation6 + $0x70] sm:$0xff]
    %v60 = vld [vmem:[#allocation6 + $0x78] sm:$0xff]
    %61 = vmatprep.subr.mxu0 0.0
    %62 = vmatpush1.msra.mxu0 %v45
    %63 = vmatprep.subr.mxu0 0.0
    %64 = vmatpush1.msra.mxu0 %v46
    %65 = vmatprep.subr.mxu0 0.0
    %66 = vmatpush1.msra.mxu0 %v47
    %67 = vmatprep.subr.mxu0 0.0
    %68 = vmatpush1.msra.mxu0 %v48
    %69 = vmatprep.subr.mxu0 0.0
    %70 = vmatpush1.msra.mxu0 %v49
    %71 = vmatprep.subr.mxu0 0.0
    %72 = vmatpush1.msra.mxu0 %v50
    %73 = vmatprep.subr.mxu0 0.0
    %74 = vmatpush1.msra.mxu0 %v51
    %75 = vmatprep.subr.mxu0 0.0
    %76 = vmatpush1.msra.mxu0 %v52
    %77 = vmatprep.subr.mxu0 0.0
    %78 = vmatpush1.msra.mxu0 %v53
    %79 = vmatprep.subr.mxu0 0.0
    %80 = vmatpush1.msra.mxu0 %v54
    %81 = vmatprep.subr.mxu0 0.0
    %82 = vmatpush1.msra.mxu0 %v55
    %83 = vmatprep.subr.mxu0 0.0
    %84 = vmatpush1.msra.mxu0 %v56
    %85 = vmatprep.subr.mxu0 0.0
    %86 = vmatpush1.msra.mxu0 %v57
    %87 = vmatprep.subr.mxu0 0.0
    %88 = vmatpush1.msra.mxu0 %v58
    %89 = vmatprep.subr.mxu0 0.0
    %90 = vmatpush1.msra.mxu0 %v59
    %91 = vmatprep.subr.mxu0 0.0
    %92 = vmatpush1.msra.mxu0 %v60
    %93 = vmatprep.subr.mxu0 0.0
    %94 = vmatpush1.msra.mxu0 0.0
    %95 = vmatprep.subr.mxu0 0.0
    %96 = vmatpush1.msra.mxu0 0.0
    %97 = vmatprep.subr.mxu0 0.0
    %98 = vmatpush1.msra.mxu0 0.0
    %99 = vmatprep.subr.mxu0 0.0
    %100 = vmatpush1.msra.mxu0 0.0
    %101 = vmatprep.subr.mxu0 0.0
    %102 = vmatpush1.msra.mxu0 0.0
    %103 = vmatprep.subr.mxu0 0.0
    %104 = vmatpush1.msra.mxu0 0.0
    %105 = vmatprep.subr.mxu0 0.0
    %106 = vmatpush1.msra.mxu0 0.0
    %107 = vmatprep.subr.mxu0 0.0
    %108 = vmatpush1.msra.mxu0 0.0
    %109 = vmatprep.subr.mxu0 0.0
    %110 = vmatpush1.msra.mxu0 0.0
    %111 = vmatprep.subr.mxu0 0.0
    %112 = vmatpush1.msra.mxu0 0.0
    %113 = vmatprep.subr.mxu0 0.0
    %114 = vmatpush1.msra.mxu0 0.0
    %115 = vmatprep.subr.mxu0 0.0
    %116 = vmatpush1.msra.mxu0 0.0
    %117 = vmatprep.subr.mxu0 0.0
    %118 = vmatpush1.msra.mxu0 0.0
    %119 = vmatprep.subr.mxu0 0.0
    %120 = vmatpush1.msra.mxu0 0.0
    %121 = vmatprep.subr.mxu0 0.0
    %122 = vmatpush1.msra.mxu0 0.0
    %123 = vmatprep.subr.mxu0 0.0
    %124 = vmatpush1.msra.mxu0 0.0
    %125 = vmatprep.mubr.f32.mxu0 0.0
    %126 = vmatmul.mubr.f32.gmra.mrb[0].mxu0 %v43
    %v127 = vpop.f32.mrb[0].mxu0
    %v128 = vadd.f32 0.0, %v127
    %v129 = vpop.f32.mrb[0].mxu0
    %130 = vmatprep.mubr.f32.mxu0 0.0
    %131 = vmatmul.mubr.f32.gmra.mrb[0].mxu0 %v44
    %v132 = vpop.f32.mrb[0].mxu0
    %v133 = vadd.f32 0.0, %v132
    %v134 = vpop.f32.mrb[0].mxu0
    %135 = vdwg.mxu0
    %p136 = scmp.eq.s32.totalorder 0, 0
    // Predicated region
    $region22: #{tpu_custom_call.1} parent=1 // pred_check
      %p137 = pneg %p136
    $region23: #{tpu_custom_call.1} parent=1 // pred_check_branch
      %139 = sbr.rel (%p137) target = $region25
    $region24: #{tpu_custom_call.1} parent=1 // pred_region
      %140 = vst [vmem:[#allocation2] sm:$0xff] %v128
      %141 = vst [vmem:[#allocation2 + $0x8] sm:$0xff] %v133
    $region25: #{tpu_custom_call.1} parent=1 // pred_fallthru
      _
    %p142 = scmp.gt.s32.totalorder 0, 0
    // Predicated region
    $region26: #{tpu_custom_call.1} parent=1 // pred_check
      %p143 = pneg %p142
    $region27: #{tpu_custom_call.1} parent=1 // pred_check_branch
      %145 = sbr.rel (%p143) target = $region29
    $region28: #{tpu_custom_call.1} parent=1 // pred_region
      %v146 = vld [vmem:[#allocation2] sm:$0xff]
      %v147 = vld [vmem:[#allocation2 + $0x8] sm:$0xff]
      %v148 = vadd.f32 %v146, %v128
      %v149 = vadd.f32 %v147, %v133
      %150 = vst [vmem:[#allocation2] sm:$0xff] %v148
      %151 = vst [vmem:[#allocation2 + $0x8] sm:$0xff] %v149
    $region29: #{tpu_custom_call.1} parent=1 // pred_fallthru
      _
    // Predicated region
    $region30: #{tpu_custom_call.1} parent=1 // pred_check
      %p152 = pneg %p136
    $region31: #{tpu_custom_call.1} parent=1 // pred_check_branch
      %154 = sbr.rel (%p152) target = $region33
    $region32: #{tpu_custom_call.1} parent=1 // pred_region
      %v155 = vld [vmem:[#allocation2] sm:$0xff]
      %v156 = vld [vmem:[#allocation2 + $0x8] sm:$0xff]
      %v157 = vld [vmem:[%s2] sm:$0x1]
      %v159 = vlaneseq
      %v160 = vshrl.u32 %v159, 7
      %v161 = vsub.s32 0, %v160
      %v162 = vrot.slane %v157, %v161
      %v164 = vadd.f32 %v155, %v162
      %v165 = vadd.f32 %v156, %v162
      %166 = vst [vmem:[#allocation8] sm:$0xff] %v164
      %167 = vst [vmem:[#allocation8 + $0x8] sm:$0xff] %v165
    $region33: #{tpu_custom_call.1} parent=1 // pred_fallthru
      _
    // Predicated region
    $region34: #{tpu_custom_call.1} parent=1 // pred_check
      _
    $region35: #{tpu_custom_call.1} parent=1 // pred_check_branch
      %169 = sbr.rel (0) target = $region37
    $region36: #{tpu_custom_call.1} parent=1 // pred_region
      %s171 = ssub.s32 256, 256
      %172 = vsyncadd [#allocation5], %s171
      %s173 = sshll.u32 [#allocation8], 4
      %s174 = int_to_ptr.vmem [resolvable:$true] %s173
      %179 = dma.vmem_to_hbm [thread:$0]  %s174, 256, %s3, [#allocation5], 128, 128, 8
    $region37: #{tpu_custom_call.1} parent=1 // pred_fallthru
      _
    // Predicated region
    $region38: #{tpu_custom_call.1} parent=1 // pred_check
      _
    $region39: #{tpu_custom_call.1} parent=1 // pred_check_branch
      %181 = sbr.rel (0) target = $region41
    $region40: #{tpu_custom_call.1} parent=1 // pred_region
      %182 = dma.done [#allocation5], 256
    $region41: #{tpu_custom_call.1} parent=1 // pred_fallthru
      _
    %183 = vsyncpa [#allocation4], 1
    %184 = vsyncpa [#allocation7], 1
    %185 = vsyncpa [#allocation5], 1

</llo_original>
